<compile_context>
chip_gen: v6e
topology: v6e:2x2x1
jax: 0.10.0
libtpu: 0.0.40
codegen_flags: <defaults>
</compile_context>

<pallas_src>
import math

import jax
import jax.numpy as jnp
from jax.experimental import pallas as pl
from jax.experimental.pallas import tpu as pltpu


# ------------------------------- config --------------------------------------
INPUT_SIZE = 32
HIDDEN_SIZES = [64, 64]
OUTPUT_SIZE = 16
DROPOUT_P = 0.0          # p=0 -> identity (eval semantics)

H1, H2 = HIDDEN_SIZES
LANE = 128               # TPU lane width; batch tiles are multiples of this
MAX_TILE_B = 512         # cap batch tile (well past the HBM-roofline knee)


# ----------------------------- Pallas kernel ---------------------------------
def basic_nn_kernel(x_ref, w1_ref, w2_ref, w3_ref, b1_ref, b2_ref, b3_ref, o_ref):
    """Fused 3-layer MLP forward on one batch tile, feature-major layout.

    x_ref : (TILE_B, 32)  f32   (row-major input tile; cast to bf16 in-kernel)
    w*_ref: bf16 weights in torch (out, in) layout: (64,32), (64,64), (16,64)
    b*_ref: f32 bias columns: (64,1), (64,1), (16,1)
    o_ref : (16, TILE_B)  f32   (features on sublanes, batch on lanes -> dense)
    """
    x_bf = x_ref[...].astype(jnp.bfloat16)                       # cast in-kernel

    # Layer 0: Linear -> tanh   (no dropout on first layer)
    # Contract both operands' last dim: (H1, in) x (TILE_B, in) -> (H1, TILE_B)
    h = jax.lax.dot_general(
        w1_ref[...], x_bf,
        dimension_numbers=(((1,), (1,)), ((), ())),
        preferred_element_type=jnp.float32,
    )
    h = jnp.tanh(h + b1_ref[...])                                # f32, v5e-safe

    # Layer 1: Linear -> Dropout(p=0, identity) -> tanh
    h = jnp.dot(w2_ref[...], h.astype(jnp.bfloat16),
                preferred_element_type=jnp.float32)              # (H2, TILE_B)
    h = jnp.tanh(h + b2_ref[...])

    # Output layer: Linear, no activation (applied outside per module spec)
    out = jnp.dot(w3_ref[...], h.astype(jnp.bfloat16),
                  preferred_element_type=jnp.float32)            # (16, TILE_B)
    o_ref[...] = out + b3_ref[...]


# ------------------------------- wrapper --------------------------------------
def _round_up(x, m):
    return ((x + m - 1) // m) * m


def _choose_tile_b(batch):
    """>=2 tiles whenever possible (so v7x can shard the batch across both
    TensorCores), tile a multiple of 128 (batch is on lanes -> dense unmasked
    output stores), capped at MAX_TILE_B."""
    per_core = -(-batch // 2)
    tile = max(LANE, _round_up(per_core, LANE))
    return min(MAX_TILE_B, tile)


def basic_nn_forward(x, w1, w2, w3, b1, b2, b3):
    """x: (B, INPUT_SIZE) f32. Returns (B, OUTPUT_SIZE) f32."""
    B = x.shape[0]
    tile_b = _choose_tile_b(B)
    n_tiles = -(-B // tile_b)
    b_pad = n_tiles * tile_b
    if b_pad != B:
        x = jnp.pad(x, ((0, b_pad - B), (0, 0)))

    param_spec = lambda arr: pl.BlockSpec(arr.shape, lambda i: (0, 0))
    # NOTE: constant index_map -> params are revisited (DMA'd once, VMEM
    # resident). pl.Buffered(1) would drop the spare pipeline buffer too, but
    # the ~30 KB saved is negligible, so it is omitted for portability.

    flops = 2 * b_pad * (INPUT_SIZE * H1 + H1 * H2 + H2 * OUTPUT_SIZE)
    transcendentals = b_pad * (H1 + H2)
    bytes_accessed = (
        b_pad * INPUT_SIZE * 4                                   # x (f32 in)
        + OUTPUT_SIZE * b_pad * 4                                # out (f32)
        + 2 * (H1 * INPUT_SIZE + H2 * H1 + OUTPUT_SIZE * H2)     # bf16 weights
        + 4 * (H1 + H2 + OUTPUT_SIZE)                            # f32 biases
    )

    out_t = pl.pallas_call(
        basic_nn_kernel,
        out_shape=jax.ShapeDtypeStruct((OUTPUT_SIZE, b_pad), jnp.float32),
        grid=(n_tiles,),
        in_specs=[
            pl.BlockSpec((tile_b, INPUT_SIZE), lambda i: (i, 0)),
            param_spec(w1), param_spec(w2), param_spec(w3),
            param_spec(b1), param_spec(b2), param_spec(b3),
        ],
        out_specs=pl.BlockSpec((OUTPUT_SIZE, tile_b), lambda i: (0, i)),
        compiler_params=pltpu.CompilerParams(
            dimension_semantics=("parallel",),   # v7x: 2 TCs share the batch axis
        ),
        cost_estimate=pl.CostEstimate(
            flops=flops,
            transcendentals=transcendentals,
            bytes_accessed=bytes_accessed,
        ),
    )(x, w1, w2, w3, b1, b2, b3)

    # Compact (16, B) -> (B, 16): tiny transpose over dense data (no padded
    # 128-lane slab is ever re-read in the wrapper anymore).
    return out_t[:, :B].T


# --------------------------- parameter initialization ------------------------
def init_params(key):
    """Matches torch init: xavier_uniform_(weight, gain=calculate_gain('sigmoid')==1.0)
    on (out, in) weights; bias.data.fill_(0)."""
    gain = 1.0
    sizes = [INPUT_SIZE] + list(HIDDEN_SIZES) + [OUTPUT_SIZE]
    params = []
    for i in range(len(sizes) - 1):
        key, sub = jax.random.split(key)
        fan_in, fan_out = sizes[i], sizes[i + 1]
        bound = gain * math.sqrt(6.0 / (fan_in + fan_out))
        w = jax.random.uniform(sub, (fan_out, fan_in), jnp.float32, -bound, bound)
        b = jnp.zeros((fan_out,), dtype=jnp.float32)
        params.append((w, b))
    return params


def pack_params(params):
    """Kernel-side params: bf16 weights in (out, in) layout, f32 bias columns."""
    (w1, b1), (w2, b2), (w3, b3) = params
    return (
        w1.astype(jnp.bfloat16), w2.astype(jnp.bfloat16), w3.astype(jnp.bfloat16),
        b1.reshape(-1, 1), b2.reshape(-1, 1), b3.reshape(-1, 1),
    )


# --------------------------------- reference ---------------------------------
def reference_forward(x, params):
    """Pure-JAX reference mirroring the kernel's bf16-operand / f32-accumulate math."""
    (w1, b1), (w2, b2), (w3, b3) = params
    bf = jnp.bfloat16
    h = jnp.dot(x.astype(bf), w1.T.astype(bf), preferred_element_type=jnp.float32) + b1
    h = jnp.tanh(h)
    h = jnp.dot(h.astype(bf), w2.T.astype(bf), preferred_element_type=jnp.float32) + b2
    h = jnp.tanh(h)  # dropout p=0 -> identity
    return jnp.dot(h.astype(bf), w3.T.astype(bf), preferred_element_type=jnp.float32) + b3


# ----------------------------------- main ------------------------------------
if __name__ == "__main__":
    BATCH = 200  # not a multiple of 128 on purpose: exercises pad path; 2 tiles
    # TODO(synk): dropout with p>0 (training mode) would need pltpu.prng_* masking;
    # here p=0.0 so dropout is the identity, matching eval semantics exactly.

    key = jax.random.PRNGKey(0)
    key, xkey = jax.random.split(key)
    x = jax.random.normal(xkey, (BATCH, INPUT_SIZE), dtype=jnp.float32)

    params = init_params(key)
    kernel_params = pack_params(params)

    out = basic_nn_forward(x, *kernel_params)
    out = jax.block_until_ready(out)

    ref = reference_forward(x, params)
    assert out.shape == (BATCH, OUTPUT_SIZE), out.shape
    assert jnp.allclose(out, ref, atol=2e-3, rtol=2e-2), "mismatch vs reference"

    print("KERNEL_OK")
</pallas_src>

<mosaic_0001>
module attributes {stable_mosaic.version = 11 : i64} {
  func.func @basic_nn_kernel(%arg0: i32, %arg1: memref<128x32xf32, #tpu.memory_space<vmem>>, %arg2: memref<64x32xbf16, #tpu.memory_space<vmem>>, %arg3: memref<64x64xbf16, #tpu.memory_space<vmem>>, %arg4: memref<16x64xbf16, #tpu.memory_space<vmem>>, %arg5: memref<64x1xf32, #tpu.memory_space<vmem>>, %arg6: memref<64x1xf32, #tpu.memory_space<vmem>>, %arg7: memref<16x1xf32, #tpu.memory_space<vmem>>, %arg8: memref<16x128xf32, #tpu.memory_space<vmem>>) attributes {dimension_semantics = [#tpu.dimension_semantics<parallel>], iteration_bounds = array<i64: 2>, scalar_prefetch = 0 : i64, scratch_operands = 0 : i64, tpu.core_type = #tpu.core_type<tc>, window_params = [{transform_indices = @transform_0, window_bounds = array<i64: 128, 32>}, {pipeline_mode = #tpu.pipeline_mode<synchronous>, transform_indices = @transform_1, window_bounds = array<i64: 64, 32>}, {pipeline_mode = #tpu.pipeline_mode<synchronous>, transform_indices = @transform_2, window_bounds = array<i64: 64, 64>}, {pipeline_mode = #tpu.pipeline_mode<synchronous>, transform_indices = @transform_3, window_bounds = array<i64: 16, 64>}, {pipeline_mode = #tpu.pipeline_mode<synchronous>, transform_indices = @transform_4, window_bounds = array<i64: 64, 1>}, {pipeline_mode = #tpu.pipeline_mode<synchronous>, transform_indices = @transform_5, window_bounds = array<i64: 64, 1>}, {pipeline_mode = #tpu.pipeline_mode<synchronous>, transform_indices = @transform_6, window_bounds = array<i64: 16, 1>}, {transform_indices = @transform_7, window_bounds = array<i64: 16, 128>}]} {
    %c0 = arith.constant 0 : index
    %c0_0 = arith.constant 0 : index
    %0 = vector.load %arg1[%c0, %c0_0] : memref<128x32xf32, #tpu.memory_space<vmem>>, vector<128x32xf32>
    %1 = arith.truncf %0 : vector<128x32xf32> to vector<128x32xbf16>
    %c0_1 = arith.constant 0 : index
    %c0_2 = arith.constant 0 : index
    %2 = vector.load %arg2[%c0_1, %c0_2] : memref<64x32xbf16, #tpu.memory_space<vmem>>, vector<64x32xbf16>
    %cst = arith.constant dense<0.000000e+00> : vector<64x128xf32>
    %3 = tpu.matmul %2, %1, %cst {dimension_numbers = #tpu.dot_dimension_numbers<[1], [1], [0], [0], [0, 0, 1, 0], [], []>} : vector<64x32xbf16>, vector<128x32xbf16>, vector<64x128xf32> -> vector<64x128xf32>
    %c0_3 = arith.constant 0 : index
    %c0_4 = arith.constant 0 : index
    %4 = vector.load %arg5[%c0_3, %c0_4] : memref<64x1xf32, #tpu.memory_space<vmem>>, vector<64x1xf32>
    %5 = vector.broadcast %4 : vector<64x1xf32> to vector<64x128xf32>
    %6 = arith.addf %3, %5 : vector<64x128xf32>
    %7 = math.tanh %6 : vector<64x128xf32>
    %c0_5 = arith.constant 0 : index
    %c0_6 = arith.constant 0 : index
    %8 = vector.load %arg3[%c0_5, %c0_6] : memref<64x64xbf16, #tpu.memory_space<vmem>>, vector<64x64xbf16>
    %9 = arith.truncf %7 : vector<64x128xf32> to vector<64x128xbf16>
    %cst_7 = arith.constant dense<0.000000e+00> : vector<64x128xf32>
    %10 = tpu.matmul %8, %9, %cst_7 {dimension_numbers = #tpu.dot_dimension_numbers<[1], [0], [0], [1], [0, 0, 1, 1], [], []>} : vector<64x64xbf16>, vector<64x128xbf16>, vector<64x128xf32> -> vector<64x128xf32>
    %c0_8 = arith.constant 0 : index
    %c0_9 = arith.constant 0 : index
    %11 = vector.load %arg6[%c0_8, %c0_9] : memref<64x1xf32, #tpu.memory_space<vmem>>, vector<64x1xf32>
    %12 = vector.broadcast %11 : vector<64x1xf32> to vector<64x128xf32>
    %13 = arith.addf %10, %12 : vector<64x128xf32>
    %14 = math.tanh %13 : vector<64x128xf32>
    %c0_10 = arith.constant 0 : index
    %c0_11 = arith.constant 0 : index
    %15 = vector.load %arg4[%c0_10, %c0_11] : memref<16x64xbf16, #tpu.memory_space<vmem>>, vector<16x64xbf16>
    %16 = arith.truncf %14 : vector<64x128xf32> to vector<64x128xbf16>
    %cst_12 = arith.constant dense<0.000000e+00> : vector<16x128xf32>
    %17 = tpu.matmul %15, %16, %cst_12 {dimension_numbers = #tpu.dot_dimension_numbers<[1], [0], [0], [1], [0, 0, 1, 1], [], []>} : vector<16x64xbf16>, vector<64x128xbf16>, vector<16x128xf32> -> vector<16x128xf32>
    %c0_13 = arith.constant 0 : index
    %c0_14 = arith.constant 0 : index
    %18 = vector.load %arg7[%c0_13, %c0_14] : memref<16x1xf32, #tpu.memory_space<vmem>>, vector<16x1xf32>
    %19 = vector.broadcast %18 : vector<16x1xf32> to vector<16x128xf32>
    %20 = arith.addf %17, %19 : vector<16x128xf32>
    %c0_15 = arith.constant 0 : index
    %c0_16 = arith.constant 0 : index
    %21 = vector.load %arg8[%c0_15, %c0_16] : memref<16x128xf32, #tpu.memory_space<vmem>>, vector<16x128xf32>
    tpu.vector_store %arg8[%c0_15, %c0_16], %20 {strides = array<i32>} : memref<16x128xf32, #tpu.memory_space<vmem>>, vector<16x128xf32>,
    return
  }
  func.func @transform_0(%arg0: i32) -> (i32, i32) {
    %c0_i32 = arith.constant 0 : i32
    %c0_i32_0 = arith.constant 0 : i32
    return %arg0, %c0_i32 : i32, i32
  }
  func.func @transform_1(%arg0: i32) -> (i32, i32) {
    %c0_i32 = arith.constant 0 : i32
    %c0_i32_0 = arith.constant 0 : i32
    %c0_i32_1 = arith.constant 0 : i32
    return %c0_i32, %c0_i32_0 : i32, i32
  }
  func.func @transform_2(%arg0: i32) -> (i32, i32) {
    %c0_i32 = arith.constant 0 : i32
    %c0_i32_0 = arith.constant 0 : i32
    %c0_i32_1 = arith.constant 0 : i32
    return %c0_i32, %c0_i32_0 : i32, i32
  }
  func.func @transform_3(%arg0: i32) -> (i32, i32) {
    %c0_i32 = arith.constant 0 : i32
    %c0_i32_0 = arith.constant 0 : i32
    %c0_i32_1 = arith.constant 0 : i32
    return %c0_i32, %c0_i32_0 : i32, i32
  }
  func.func @transform_4(%arg0: i32) -> (i32, i32) {
    %c0_i32 = arith.constant 0 : i32
    %c0_i32_0 = arith.constant 0 : i32
    %c0_i32_1 = arith.constant 0 : i32
    return %c0_i32, %c0_i32_0 : i32, i32
  }
  func.func @transform_5(%arg0: i32) -> (i32, i32) {
    %c0_i32 = arith.constant 0 : i32
    %c0_i32_0 = arith.constant 0 : i32
    %c0_i32_1 = arith.constant 0 : i32
    return %c0_i32, %c0_i32_0 : i32, i32
  }
  func.func @transform_6(%arg0: i32) -> (i32, i32) {
    %c0_i32 = arith.constant 0 : i32
    %c0_i32_0 = arith.constant 0 : i32
    %c0_i32_1 = arith.constant 0 : i32
    return %c0_i32, %c0_i32_0 : i32, i32
  }
  func.func @transform_7(%arg0: i32) -> (i32, i32) {
    %c0_i32 = arith.constant 0 : i32
    %c0_i32_0 = arith.constant 0 : i32
    return %c0_i32, %arg0 : i32, i32
  }
}

</mosaic_0001>

<llo_original>
// kernel: tpu_custom_call.1
$region0: #{tpu_custom_call.1}
  #allocation0 [shape = 'u32[]', space=smem, size = 0x4, offset = 0x4, fixed_abs, tag = 'smem constant byte address 0x4 - core index']
  #allocation1 [shape = 'u32[144,128]{1,0:T(1,128)}', space=vmem, size = 0x12000, scoped, tag = 'internal scratch']
  %s0 = inlined_call_operand.vmem [shape: f32[256,32], index: 0, kind: input, shape index: {}]
  %s1 = inlined_call_operand.vmem [shape: bf16[64,32], index: 1, kind: input, shape index: {}]
  %s2 = inlined_call_operand.vmem [shape: bf16[64,64], index: 2, kind: input, shape index: {}]
  %s3 = inlined_call_operand.vmem [shape: bf16[16,64], index: 3, kind: input, shape index: {}]
  %s4 = inlined_call_operand.vmem [shape: f32[64,1], index: 4, kind: input, shape index: {}]
  %s5 = inlined_call_operand.vmem [shape: f32[64,1], index: 5, kind: input, shape index: {}]
  %s6 = inlined_call_operand.vmem [shape: f32[16,1], index: 6, kind: input, shape index: {}]
  %s7 = inlined_call_operand.hbm [shape: f32[16,256], index: 7, kind: output, shape index: {}]
  %s8 = sld [smem:[#allocation0]]
  $region61: #{tpu_custom_call.1} parent=0
    _
  %s10 = ssub.s32 1, %s8
  %s11 = scalar_select 0, %s10, %s8
  $region1: #{tpu_custom_call.1} parent=0
    #allocation2 [shape = 'u8[16384]{0}', space=vmem, size = 0x4000, scoped, tag = 'output window, operand 0']
    #allocation3 [shape = 's32[2]{0}', space=sflag, size = 0x8, scoped, tag = 'scoped memory for tpu_custom_call.1']
    %12 = vsyncpa [#allocation3], 0
    %s13 = scalar_lea.sflag [#allocation3], 1
    %14 = vsyncpa %s13, 0
    loop: start=0, step=1, limit=4
    $region2: #{tpu_custom_call.1} parent=1 // loop_pre_header
      _
    $region3: #{tpu_custom_call.1} parent=1 // loop_header
      %s16 = sphi 0, %s20
      %p17 = scmp.ge.s32.totalorder %s16, 4
      %s26 = sphi 0, %s28
      %s29 = sphi 0, %s26
      %s30 = sphi 0, %s29
      %s46 = sphi 0, %s30
      %s50 = sphi 0, %s50
      %s52 = sphi 0, %s50
      %s53 = sphi 0, %s52
      %s67 = sphi 0, %s53
      %s71 = sphi 0, %s71
      %s73 = sphi 0, %s71
      %s74 = sphi 0, %s73
      %s88 = sphi 0, %s74
      %s92 = sphi 0, %s92
      %s94 = sphi 0, %s92
      %s95 = sphi 0, %s94
      %s109 = sphi 0, %s95
      %s113 = sphi 0, %s113
      %s115 = sphi 0, %s113
      %s116 = sphi 0, %s115
      %s130 = sphi 0, %s116
      %s134 = sphi 0, %s134
      %s136 = sphi 0, %s134
      %s137 = sphi 0, %s136
      %s151 = sphi 0, %s137
      %s155 = sphi 0, %s155
      %s157 = sphi 0, %s155
      %s158 = sphi 0, %s157
      %s172 = sphi 0, %s158
      %s178 = sphi 0, %s180
      %s181 = sphi 0, %s178
      %s182 = sphi 0, %s181
      %s198 = sphi 0, %s182
    $region4: #{tpu_custom_call.1} parent=1 // loop_header_branch
      %19 = sbr.rel (%p17) target = $region8
    $region5: #{tpu_custom_call.1} parent=1 // loop_body
      %s21 = ssub.s32 %s16, 1
      %s22 = ssub.s32 %s16, 2
      %s23 = sadd.s32 %s16, 1
      %s24 = ssub.s32 %s16, %s23
      %p25 = scmp.eq.s32.totalorder %s24, 0
      %s27 = sadd.s32 %s26, 1
      %s28 = scalar_select %p25, %s26, %s27
      %p31 = pneg %p25
      %p32 = scmp.eq.s32.totalorder %s16, 1
      %p33 = por %p31, %p32
      %p34 = scmp.ne.s32.totalorder %s26, %s29
      %p35 = scmp.eq.s32.totalorder %s16, 0
      %p36 = por %p34, %p35
      %p37 = scmp.ne.s32.totalorder %s26, %s29
      %p38 = scmp.eq.s32.totalorder %s21, 1
      %p39 = por %p37, %p38
      %p40 = scmp.ne.s32.totalorder %s29, %s30
      %p41 = scmp.eq.s32.totalorder %s21, 0
      %p42 = por %p40, %p41
      %p43 = scmp.ne.s32.totalorder %s29, %s30
      %p44 = scmp.eq.s32.totalorder %s22, 1
      %p45 = por %p43, %p44
      %p47 = scmp.ne.s32.totalorder %s30, %s46
      %p48 = scmp.eq.s32.totalorder %s22, 0
      %p49 = por %p47, %p48
      %s51 = sadd.s32 %s50, 1
      %p54 = scmp.eq.s32.totalorder %s16, 1
      %p55 = scmp.ne.s32.totalorder %s50, %s52
      %p56 = scmp.eq.s32.totalorder %s16, 0
      %p57 = por %p55, %p56
      %p58 = scmp.ne.s32.totalorder %s50, %s52
      %p59 = scmp.eq.s32.totalorder %s21, 1
      %p60 = por %p58, %p59
      %p61 = scmp.ne.s32.totalorder %s52, %s53
      %p62 = scmp.eq.s32.totalorder %s21, 0
      %p63 = por %p61, %p62
      %p64 = scmp.ne.s32.totalorder %s52, %s53
      %p65 = scmp.eq.s32.totalorder %s22, 1
      %p66 = por %p64, %p65
      %p68 = scmp.ne.s32.totalorder %s53, %s67
      %p69 = scmp.eq.s32.totalorder %s22, 0
      %p70 = por %p68, %p69
      %s72 = sadd.s32 %s71, 1
      %p75 = scmp.eq.s32.totalorder %s16, 1
      %p76 = scmp.ne.s32.totalorder %s71, %s73
      %p77 = scmp.eq.s32.totalorder %s16, 0
      %p78 = por %p76, %p77
      %p79 = scmp.ne.s32.totalorder %s71, %s73
      %p80 = scmp.eq.s32.totalorder %s21, 1
      %p81 = por %p79, %p80
      %p82 = scmp.ne.s32.totalorder %s73, %s74
      %p83 = scmp.eq.s32.totalorder %s21, 0
      %p84 = por %p82, %p83
      %p85 = scmp.ne.s32.totalorder %s73, %s74
      %p86 = scmp.eq.s32.totalorder %s22, 1
      %p87 = por %p85, %p86
      %p89 = scmp.ne.s32.totalorder %s74, %s88
      %p90 = scmp.eq.s32.totalorder %s22, 0
      %p91 = por %p89, %p90
      %s93 = sadd.s32 %s92, 1
      %p96 = scmp.eq.s32.totalorder %s16, 1
      %p97 = scmp.ne.s32.totalorder %s92, %s94
      %p98 = scmp.eq.s32.totalorder %s16, 0
      %p99 = por %p97, %p98
      %p100 = scmp.ne.s32.totalorder %s92, %s94
      %p101 = scmp.eq.s32.totalorder %s21, 1
      %p102 = por %p100, %p101
      %p103 = scmp.ne.s32.totalorder %s94, %s95
      %p104 = scmp.eq.s32.totalorder %s21, 0
      %p105 = por %p103, %p104
      %p106 = scmp.ne.s32.totalorder %s94, %s95
      %p107 = scmp.eq.s32.totalorder %s22, 1
      %p108 = por %p106, %p107
      %p110 = scmp.ne.s32.totalorder %s95, %s109
      %p111 = scmp.eq.s32.totalorder %s22, 0
      %p112 = por %p110, %p111
      %s114 = sadd.s32 %s113, 1
      %p117 = scmp.eq.s32.totalorder %s16, 1
      %p118 = scmp.ne.s32.totalorder %s113, %s115
      %p119 = scmp.eq.s32.totalorder %s16, 0
      %p120 = por %p118, %p119
      %p121 = scmp.ne.s32.totalorder %s113, %s115
      %p122 = scmp.eq.s32.totalorder %s21, 1
      %p123 = por %p121, %p122
      %p124 = scmp.ne.s32.totalorder %s115, %s116
      %p125 = scmp.eq.s32.totalorder %s21, 0
      %p126 = por %p124, %p125
      %p127 = scmp.ne.s32.totalorder %s115, %s116
      %p128 = scmp.eq.s32.totalorder %s22, 1
      %p129 = por %p127, %p128
      %p131 = scmp.ne.s32.totalorder %s116, %s130
      %p132 = scmp.eq.s32.totalorder %s22, 0
      %p133 = por %p131, %p132
      %s135 = sadd.s32 %s134, 1
      %p138 = scmp.eq.s32.totalorder %s16, 1
      %p139 = scmp.ne.s32.totalorder %s134, %s136
      %p140 = scmp.eq.s32.totalorder %s16, 0
      %p141 = por %p139, %p140
      %p142 = scmp.ne.s32.totalorder %s134, %s136
      %p143 = scmp.eq.s32.totalorder %s21, 1
      %p144 = por %p142, %p143
      %p145 = scmp.ne.s32.totalorder %s136, %s137
      %p146 = scmp.eq.s32.totalorder %s21, 0
      %p147 = por %p145, %p146
      %p148 = scmp.ne.s32.totalorder %s136, %s137
      %p149 = scmp.eq.s32.totalorder %s22, 1
      %p150 = por %p148, %p149
      %p152 = scmp.ne.s32.totalorder %s137, %s151
      %p153 = scmp.eq.s32.totalorder %s22, 0
      %p154 = por %p152, %p153
      %s156 = sadd.s32 %s155, 1
      %p159 = scmp.eq.s32.totalorder %s16, 1
      %p160 = scmp.ne.s32.totalorder %s155, %s157
      %p161 = scmp.eq.s32.totalorder %s16, 0
      %p162 = por %p160, %p161
      %p163 = scmp.ne.s32.totalorder %s155, %s157
      %p164 = scmp.eq.s32.totalorder %s21, 1
      %p165 = por %p163, %p164
      %p166 = scmp.ne.s32.totalorder %s157, %s158
      %p167 = scmp.eq.s32.totalorder %s21, 0
      %p168 = por %p166, %p167
      %p169 = scmp.ne.s32.totalorder %s157, %s158
      %p170 = scmp.eq.s32.totalorder %s22, 1
      %p171 = por %p169, %p170
      %p173 = scmp.ne.s32.totalorder %s158, %s172
      %p174 = scmp.eq.s32.totalorder %s22, 0
      %p175 = por %p173, %p174
      %s176 = ssub.s32 %s16, %s23
      %p177 = scmp.eq.s32.totalorder %s176, 0
      %s179 = sadd.s32 %s178, 1
      %s180 = scalar_select %p177, %s178, %s179
      %p183 = pneg %p177
      %p184 = scmp.eq.s32.totalorder %s16, 1
      %p185 = por %p183, %p184
      %p186 = scmp.ne.s32.totalorder %s178, %s181
      %p187 = scmp.eq.s32.totalorder %s16, 0
      %p188 = por %p186, %p187
      %p189 = scmp.ne.s32.totalorder %s178, %s181
      %p190 = scmp.eq.s32.totalorder %s21, 1
      %p191 = por %p189, %p190
      %p192 = scmp.ne.s32.totalorder %s181, %s182
      %p193 = scmp.eq.s32.totalorder %s21, 0
      %p194 = por %p192, %p193
      %p195 = scmp.ne.s32.totalorder %s181, %s182
      %p196 = scmp.eq.s32.totalorder %s22, 1
      %p197 = por %p195, %p196
      %p199 = scmp.ne.s32.totalorder %s182, %s198
      %p200 = scmp.eq.s32.totalorder %s22, 0
      %p201 = por %p199, %p200
      %p202 = scmp.le.s32.totalorder 1, %s16
      %p203 = scmp.lt.s32.totalorder %s16, 3
      %p204 = pnand %p202, %p203
      %p205 = pneg %p204
      // Predicated region
      $region9: #{tpu_custom_call.1} parent=5 // pred_check
        _
      $region10: #{tpu_custom_call.1} parent=5 // pred_check_branch
        %207 = sbr.rel (%p204) target = $region12
      $region11: #{tpu_custom_call.1} parent=5 // pred_region
        %s208 = ssub.s32 %s16, 1
        // Predicated region
        $region13: #{tpu_custom_call.1} parent=11 // pred_check
          %p209 = pneg %p63
        $region14: #{tpu_custom_call.1} parent=11 // pred_check_branch
          %211 = sbr.rel (%p209) target = $region16
        $region15: #{tpu_custom_call.1} parent=11 // pred_region
          _
        $region16: #{tpu_custom_call.1} parent=11 // pred_fallthru
          _
        // Predicated region
        $region17: #{tpu_custom_call.1} parent=11 // pred_check
          %p212 = pneg %p84
        $region18: #{tpu_custom_call.1} parent=11 // pred_check_branch
          %214 = sbr.rel (%p212) target = $region20
        $region19: #{tpu_custom_call.1} parent=11 // pred_region
          _
        $region20: #{tpu_custom_call.1} parent=11 // pred_fallthru
          _
        // Predicated region
        $region21: #{tpu_custom_call.1} parent=11 // pred_check
          %p215 = pneg %p105
        $region22: #{tpu_custom_call.1} parent=11 // pred_check_branch
          %217 = sbr.rel (%p215) target = $region24
        $region23: #{tpu_custom_call.1} parent=11 // pred_region
          _
        $region24: #{tpu_custom_call.1} parent=11 // pred_fallthru
          _
        // Predicated region
        $region25: #{tpu_custom_call.1} parent=11 // pred_check
          %p218 = pneg %p126
        $region26: #{tpu_custom_call.1} parent=11 // pred_check_branch
          %220 = sbr.rel (%p218) target = $region28
        $region27: #{tpu_custom_call.1} parent=11 // pred_region
          _
        $region28: #{tpu_custom_call.1} parent=11 // pred_fallthru
          _
        // Predicated region
        $region29: #{tpu_custom_call.1} parent=11 // pred_check
          %p221 = pneg %p147
        $region30: #{tpu_custom_call.1} parent=11 // pred_check_branch
          %223 = sbr.rel (%p221) target = $region32
        $region31: #{tpu_custom_call.1} parent=11 // pred_region
          _
        $region32: #{tpu_custom_call.1} parent=11 // pred_fallthru
          _
        // Predicated region
        $region33: #{tpu_custom_call.1} parent=11 // pred_check
          %p224 = pneg %p168
        $region34: #{tpu_custom_call.1} parent=11 // pred_check_branch
          %226 = sbr.rel (%p224) target = $region36
        $region35: #{tpu_custom_call.1} parent=11 // pred_region
          _
        $region36: #{tpu_custom_call.1} parent=11 // pred_fallthru
          _
      $region12: #{tpu_custom_call.1} parent=5 // pred_fallthru
        _
      %p227 = scmp.lt.s32.totalorder %s16, 2
      // Predicated region
      $region37: #{tpu_custom_call.1} parent=5 // pred_check
        %p228 = pneg %p227
      $region38: #{tpu_custom_call.1} parent=5 // pred_check_branch
        %230 = sbr.rel (%p228) target = $region40
      $region39: #{tpu_custom_call.1} parent=5 // pred_region
        // Predicated region
        $region41: #{tpu_custom_call.1} parent=39 // pred_check
          %p231 = pneg %p36
        $region42: #{tpu_custom_call.1} parent=39 // pred_check_branch
          %233 = sbr.rel (%p231) target = $region44
        $region43: #{tpu_custom_call.1} parent=39 // pred_region
          %s234 = smul.u32 16, %s16
          %p235 = scmp.lt.s32.totalorder %s234, 31
          %s236 = scalar_select %p235, %s234, 31
          %s237 = smul.addr %s236, 8
          %s238 = scalar_lea.vmem %s0, %s237
          %s239 = smul.u32 16, %s16
        $region44: #{tpu_custom_call.1} parent=39 // pred_fallthru
          _
      $region40: #{tpu_custom_call.1} parent=5 // pred_fallthru
        _
      %p240 = scmp.le.s32.totalorder 1, %s16
      %p241 = scmp.lt.s32.totalorder %s16, 3
      %p242 = pnand %p240, %p241
      %p243 = pneg %p242
      // Predicated region
      $region45: #{tpu_custom_call.1} parent=5 // pred_check
        _
      $region46: #{tpu_custom_call.1} parent=5 // pred_check_branch
        %245 = sbr.rel (%p242) target = $region48
      $region47: #{tpu_custom_call.1} parent=5 // pred_region
        %s246 = ssub.s32 %s16, 1
        %s247 = smul.u32 16, %s21
        %p248 = scmp.lt.s32.totalorder %s247, 31
        %s249 = scalar_select %p248, %s247, 31
        %s250 = smul.addr %s249, 8
        %s251 = scalar_lea.vmem %s0, %s250
        %p252 = pneg %p42
        %p253 = pneg %p39
        %p254 = pneg %p63
        %p255 = pneg %p60
        %p256 = pneg %p84
        %p257 = pneg %p81
        %p258 = pneg %p105
        %p259 = pneg %p102
        %p260 = pneg %p126
        %p261 = pneg %p123
        %p262 = pneg %p147
        %p263 = pneg %p144
        %p264 = pneg %p168
        %p265 = pneg %p165
        %p266 = pneg %p194
        %p267 = pneg %p191
        %s268 = sand.u32 %s181, 1
        %s269 = scalar_lea.sflag [#allocation3], %s268
        %s270 = sand.u32 %s181, 1
        %s271 = smul.addr %s270, 16
        %s272 = scalar_lea.vmem [#allocation2], %s271
        %s273 = smul.u32 16, %s21
        %p274 = scmp.lt.s32.totalorder %s273, 31
        %s275 = scalar_select %p274, %s273, 31
        %s276 = smul.addr %s275, 8
        %s277 = scalar_lea.vmem %s0, %s276
        %s278 = smul.u32 16, %s21
        %v280 = vld [vmem:[%s277] sm:$0xff]
        %v281 = vld [vmem:[%s277 + $0x8] sm:$0xff]
        %v282 = vld [vmem:[%s277 + $0x10] sm:$0xff]
        %v283 = vld [vmem:[%s277 + $0x18] sm:$0xff]
        %v284 = vld [vmem:[%s277 + $0x20] sm:$0xff]
        %v285 = vld [vmem:[%s277 + $0x28] sm:$0xff]
        %v286 = vld [vmem:[%s277 + $0x30] sm:$0xff]
        %v287 = vld [vmem:[%s277 + $0x38] sm:$0xff]
        %v288 = vld [vmem:[%s277 + $0x40] sm:$0xff]
        %v289 = vld [vmem:[%s277 + $0x48] sm:$0xff]
        %v290 = vld [vmem:[%s277 + $0x50] sm:$0xff]
        %v291 = vld [vmem:[%s277 + $0x58] sm:$0xff]
        %v292 = vld [vmem:[%s277 + $0x60] sm:$0xff]
        %v293 = vld [vmem:[%s277 + $0x68] sm:$0xff]
        %v294 = vld [vmem:[%s277 + $0x70] sm:$0xff]
        %v295 = vld [vmem:[%s277 + $0x78] sm:$0xff]
        %v296 = vpack.c.bf16 %v281, %v280
        %v297 = vpack.c.bf16 %v283, %v282
        %v298 = vpack.c.bf16 %v285, %v284
        %v299 = vpack.c.bf16 %v287, %v286
        %v300 = vpack.c.bf16 %v289, %v288
        %v301 = vpack.c.bf16 %v291, %v290
        %v302 = vpack.c.bf16 %v293, %v292
        %v303 = vpack.c.bf16 %v295, %v294
        %v304 = vld [vmem:[%s1] sm:$0xf]
        %v305 = vld [vmem:[%s1 + $0x4] sm:$0xf]
        %v306 = vld [vmem:[%s1 + $0x8] sm:$0xf]
        %v307 = vld [vmem:[%s1 + $0xc] sm:$0xf]
        %v308 = vld [vmem:[%s1 + $0x10] sm:$0xf]
        %v309 = vld [vmem:[%s1 + $0x14] sm:$0xf]
        %v310 = vld [vmem:[%s1 + $0x18] sm:$0xf]
        %v311 = vld [vmem:[%s1 + $0x1c] sm:$0xf]
        %v312 = vld [vmem:[%s4] sm:$0xff]
        %v313 = vld [vmem:[%s4 + $0x8] sm:$0xff]
        %v314 = vld [vmem:[%s4 + $0x10] sm:$0xff]
        %v315 = vld [vmem:[%s4 + $0x18] sm:$0xff]
        %v316 = vld [vmem:[%s4 + $0x20] sm:$0xff]
        %v317 = vld [vmem:[%s4 + $0x28] sm:$0xff]
        %v318 = vld [vmem:[%s4 + $0x30] sm:$0xff]
        %v319 = vld [vmem:[%s4 + $0x38] sm:$0xff]
        %321 = vset.pattern.permute.xlu0 0
        %322 = vperm.xlu0 %321, %v312
        %v323 = vpop.permute.xlu0 %322
        %326 = vset.pattern.permute.xlu0 0
        %327 = vperm.xlu0 %326, %v313
        %v328 = vpop.permute.xlu0 %327
        %331 = vset.pattern.permute.xlu0 0
        %332 = vperm.xlu0 %331, %v314
        %v333 = vpop.permute.xlu0 %332
        %336 = vset.pattern.permute.xlu0 0
        %337 = vperm.xlu0 %336, %v315
        %v338 = vpop.permute.xlu0 %337
        %341 = vset.pattern.permute.xlu0 0
        %342 = vperm.xlu0 %341, %v316
        %v343 = vpop.permute.xlu0 %342
        %346 = vset.pattern.permute.xlu0 0
        %347 = vperm.xlu0 %346, %v317
        %v348 = vpop.permute.xlu0 %347
        %351 = vset.pattern.permute.xlu0 0
        %352 = vperm.xlu0 %351, %v318
        %v353 = vpop.permute.xlu0 %352
        %356 = vset.pattern.permute.xlu0 0
        %357 = vperm.xlu0 %356, %v319
        %v358 = vpop.permute.xlu0 %357
        %v368 = vunpack.c.l.b16 %v304
        %v369 = vunpack.c.l.b16 %v305
        %v370 = vunpack.c.l.b16 %v306
        %v371 = vunpack.c.l.b16 %v307
        %v372 = vunpack.c.l.b16 %v308
        %v373 = vunpack.c.l.b16 %v309
        %v374 = vunpack.c.l.b16 %v310
        %v375 = vunpack.c.l.b16 %v311
        %v376 = vpack.c.b16 %v369, %v368
        %v377 = vpack.c.b16 %v371, %v370
        %v378 = vpack.c.b16 %v373, %v372
        %v379 = vpack.c.b16 %v375, %v374
        %vm380 = vcmask 261120
        %v382 = vsel %vm380, %v376, 0
        %v385 = vsel %vm380, %v377, 0
        %v388 = vsel %vm380, %v378, 0
        %v391 = vsel %vm380, %v379, 0
        %v394 = vsel %vm380, %v296, 0
        %v397 = vsel %vm380, %v297, 0
        %v400 = vsel %vm380, %v298, 0
        %v403 = vsel %vm380, %v299, 0
        %v406 = vsel %vm380, %v300, 0
        %v409 = vsel %vm380, %v301, 0
        %v412 = vsel %vm380, %v302, 0
        %v415 = vsel %vm380, %v303, 0
        %417 = vmatprep.subr.bf16.mxu0 0
        %418 = vmatpush1.bf16.xpose.msra.mxu0 %v415
        %419 = vmatprep.subr.bf16.mxu0 0
        %420 = vmatpush1.bf16.xpose.msra.mxu0 %v412
        %421 = vmatprep.subr.bf16.mxu0 0
        %422 = vmatpush1.bf16.xpose.msra.mxu0 %v409
        %423 = vmatprep.subr.bf16.mxu0 0
        %424 = vmatpush1.bf16.xpose.msra.mxu0 %v406
        %425 = vmatprep.subr.bf16.mxu0 0
        %426 = vmatpush1.bf16.xpose.msra.mxu0 %v403
        %427 = vmatprep.subr.bf16.mxu0 0
        %428 = vmatpush1.bf16.xpose.msra.mxu0 %v400
        %429 = vmatprep.subr.bf16.mxu0 0
        %430 = vmatpush1.bf16.xpose.msra.mxu0 %v397
        %431 = vmatprep.subr.bf16.mxu0 0
        %432 = vmatpush1.bf16.xpose.msra.mxu0 %v394
        %433 = vmatprep.subr.bf16.mxu0 0
        %434 = vmatpush2.bf16.xpose.msra.mxu0 0
        %435 = vmatprep.subr.bf16.mxu0 0
        %436 = vmatpush2.bf16.xpose.msra.mxu0 0
        %437 = vmatprep.subr.bf16.mxu0 0
        %438 = vmatpush2.bf16.xpose.msra.mxu0 0
        %439 = vmatprep.subr.bf16.mxu0 0
        %440 = vmatpush2.bf16.xpose.msra.mxu0 0
        %441 = vmatprep.subr.bf16.mxu0 0
        %442 = vmatpush2.bf16.xpose.msra.mxu0 0
        %443 = vmatprep.subr.bf16.mxu0 0
        %444 = vmatpush2.bf16.xpose.msra.mxu0 0
        %445 = vmatprep.subr.bf16.mxu0 0
        %446 = vmatpush2.bf16.xpose.msra.mxu0 0
        %447 = vmatprep.subr.bf16.mxu0 0
        %448 = vmatpush2.bf16.xpose.msra.mxu0 0
        %449 = vmatprep.mubr.bf16.mxu0 0
        %450 = vmatmul.mubr.bf16.gmra.mxu0 %v382
        %v451 = vpop.f32.mrf.mxu0
        %v452 = vadd.f32 %v323, %v451
        %v453 = vpop.f32.mrf.mxu0
        %v454 = vpop.f32.mrf.mxu0
        %v455 = vadd.f32 %v328, %v454
        %v456 = vpop.f32.mrf.mxu0
        %457 = vmatprep.mubr.bf16.mxu0 0
        %458 = vmatmul.mubr.bf16.gmra.mxu0 %v385
        %v459 = vpop.f32.mrf.mxu0
        %v460 = vadd.f32 %v333, %v459
        %v461 = vpop.f32.mrf.mxu0
        %v462 = vpop.f32.mrf.mxu0
        %v463 = vadd.f32 %v338, %v462
        %v464 = vpop.f32.mrf.mxu0
        %465 = vmatprep.mubr.bf16.mxu0 0
        %466 = vmatmul.mubr.bf16.gmra.mxu0 %v388
        %v467 = vpop.f32.mrf.mxu0
        %v468 = vadd.f32 %v343, %v467
        %v469 = vpop.f32.mrf.mxu0
        %v470 = vpop.f32.mrf.mxu0
        %v471 = vadd.f32 %v348, %v470
        %v472 = vpop.f32.mrf.mxu0
        %473 = vmatprep.mubr.bf16.mxu0 0
        %474 = vmatmul.mubr.bf16.gmra.mxu0 %v391
        %v475 = vpop.f32.mrf.mxu0
        %v476 = vadd.f32 %v353, %v475
        %v477 = vpop.f32.mrf.mxu0
        %v478 = vpop.f32.mrf.mxu0
        %v479 = vadd.f32 %v358, %v478
        %v480 = vpop.f32.mrf.mxu0
        %481 = vdwg.mxu0
        %v482 = vtanh.pop %v452
        %v483 = vtanh.pop %v455
        %v484 = vtanh.pop %v460
        %v485 = vtanh.pop %v463
        %v486 = vtanh.pop %v468
        %v487 = vtanh.pop %v471
        %v488 = vtanh.pop %v476
        %v489 = vtanh.pop %v479
        %v490 = vld [vmem:[%s2] sm:$0xf]
        %v491 = vld [vmem:[%s2 + $0x4] sm:$0xf]
        %v492 = vld [vmem:[%s2 + $0x8] sm:$0xf]
        %v493 = vld [vmem:[%s2 + $0xc] sm:$0xf]
        %v494 = vld [vmem:[%s2 + $0x10] sm:$0xf]
        %v495 = vld [vmem:[%s2 + $0x14] sm:$0xf]
        %v496 = vld [vmem:[%s2 + $0x18] sm:$0xf]
        %v497 = vld [vmem:[%s2 + $0x1c] sm:$0xf]
        %v498 = vpack.c.bf16 %v483, %v482
        %v499 = vpack.c.bf16 %v485, %v484
        %v500 = vpack.c.bf16 %v487, %v486
        %v501 = vpack.c.bf16 %v489, %v488
        %v502 = vld [vmem:[%s5] sm:$0xff]
        %v503 = vld [vmem:[%s5 + $0x8] sm:$0xff]
        %v504 = vld [vmem:[%s5 + $0x10] sm:$0xff]
        %v505 = vld [vmem:[%s5 + $0x18] sm:$0xff]
        %v506 = vld [vmem:[%s5 + $0x20] sm:$0xff]
        %v507 = vld [vmem:[%s5 + $0x28] sm:$0xff]
        %v508 = vld [vmem:[%s5 + $0x30] sm:$0xff]
        %v509 = vld [vmem:[%s5 + $0x38] sm:$0xff]
        %511 = vset.pattern.permute.xlu0 0
        %512 = vperm.xlu0 %511, %v502
        %v513 = vpop.permute.xlu0 %512
        %516 = vset.pattern.permute.xlu0 0
        %517 = vperm.xlu0 %516, %v503
        %v518 = vpop.permute.xlu0 %517
        %521 = vset.pattern.permute.xlu0 0
        %522 = vperm.xlu0 %521, %v504
        %v523 = vpop.permute.xlu0 %522
        %526 = vset.pattern.permute.xlu0 0
        %527 = vperm.xlu0 %526, %v505
        %v528 = vpop.permute.xlu0 %527
        %531 = vset.pattern.permute.xlu0 0
        %532 = vperm.xlu0 %531, %v506
        %v533 = vpop.permute.xlu0 %532
        %536 = vset.pattern.permute.xlu0 0
        %537 = vperm.xlu0 %536, %v507
        %v538 = vpop.permute.xlu0 %537
        %541 = vset.pattern.permute.xlu0 0
        %542 = vperm.xlu0 %541, %v508
        %v543 = vpop.permute.xlu0 %542
        %546 = vset.pattern.permute.xlu0 0
        %547 = vperm.xlu0 %546, %v509
        %v548 = vpop.permute.xlu0 %547
        %v558 = vunpack.c.l.b16 %v490
        %v559 = vunpack.c.l.b16 %v491
        %v560 = vunpack.c.l.b16 %v492
        %v561 = vunpack.c.l.b16 %v493
        %v562 = vunpack.c.l.b16 %v494
        %v563 = vunpack.c.l.b16 %v495
        %v564 = vunpack.c.l.b16 %v496
        %v565 = vunpack.c.l.b16 %v497
        %v566 = vpack.c.b16 %v559, %v558
        %v567 = vpack.c.b16 %v561, %v560
        %v568 = vpack.c.b16 %v563, %v562
        %v569 = vpack.c.b16 %v565, %v564
        %vm570 = vcmask 523264
        %v572 = vsel %vm570, %v566, 0
        %v575 = vsel %vm570, %v567, 0
        %v578 = vsel %vm570, %v568, 0
        %v581 = vsel %vm570, %v569, 0
        %583 = vmatprep.subr.bf16.mxu0 0
        %584 = vmatpush1.bf16.msra.mxu0 0
        %585 = vmatprep.subr.bf16.mxu0 0
        %586 = vmatpush1.bf16.msra.mxu0 0
        %587 = vmatprep.subr.bf16.mxu0 0
        %588 = vmatpush1.bf16.msra.mxu0 0
        %589 = vmatprep.subr.bf16.mxu0 0
        %590 = vmatpush1.bf16.msra.mxu0 0
        %591 = vmatprep.subr.bf16.mxu0 0
        %592 = vmatpush1.bf16.msra.mxu0 %v501
        %593 = vmatprep.subr.bf16.mxu0 0
        %594 = vmatpush1.bf16.msra.mxu0 %v500
        %595 = vmatprep.subr.bf16.mxu0 0
        %596 = vmatpush1.bf16.msra.mxu0 %v499
        %597 = vmatprep.subr.bf16.mxu0 0
        %598 = vmatpush1.bf16.msra.mxu0 %v498
        %599 = vmatprep.subr.bf16.mxu0 0
        %600 = vmatpush2.bf16.msra.mxu0 0
        %601 = vmatprep.subr.bf16.mxu0 0
        %602 = vmatpush2.bf16.msra.mxu0 0
        %603 = vmatprep.subr.bf16.mxu0 0
        %604 = vmatpush2.bf16.msra.mxu0 0
        %605 = vmatprep.subr.bf16.mxu0 0
        %606 = vmatpush2.bf16.msra.mxu0 0
        %607 = vmatprep.subr.bf16.mxu0 0
        %608 = vmatpush2.bf16.msra.mxu0 0
        %609 = vmatprep.subr.bf16.mxu0 0
        %610 = vmatpush2.bf16.msra.mxu0 0
        %611 = vmatprep.subr.bf16.mxu0 0
        %612 = vmatpush2.bf16.msra.mxu0 0
        %613 = vmatprep.subr.bf16.mxu0 0
        %614 = vmatpush2.bf16.msra.mxu0 0
        %615 = vmatprep.mubr.bf16.mxu0 0
        %616 = vmatmul.mubr.bf16.gmra.mxu0 %v572
        %v617 = vpop.f32.mrf.mxu0
        %v618 = vadd.f32 %v513, %v617
        %v619 = vpop.f32.mrf.mxu0
        %v620 = vpop.f32.mrf.mxu0
        %v621 = vadd.f32 %v518, %v620
        %v622 = vpop.f32.mrf.mxu0
        %623 = vmatprep.mubr.bf16.mxu0 0
        %624 = vmatmul.mubr.bf16.gmra.mxu0 %v575
        %v625 = vpop.f32.mrf.mxu0
        %v626 = vadd.f32 %v523, %v625
        %v627 = vpop.f32.mrf.mxu0
        %v628 = vpop.f32.mrf.mxu0
        %v629 = vadd.f32 %v528, %v628
        %v630 = vpop.f32.mrf.mxu0
        %631 = vmatprep.mubr.bf16.mxu0 0
        %632 = vmatmul.mubr.bf16.gmra.mxu0 %v578
        %v633 = vpop.f32.mrf.mxu0
        %v634 = vadd.f32 %v533, %v633
        %v635 = vpop.f32.mrf.mxu0
        %v636 = vpop.f32.mrf.mxu0
        %v637 = vadd.f32 %v538, %v636
        %v638 = vpop.f32.mrf.mxu0
        %639 = vmatprep.mubr.bf16.mxu0 0
        %640 = vmatmul.mubr.bf16.gmra.mxu0 %v581
        %v641 = vpop.f32.mrf.mxu0
        %v642 = vadd.f32 %v543, %v641
        %v643 = vpop.f32.mrf.mxu0
        %v644 = vpop.f32.mrf.mxu0
        %v645 = vadd.f32 %v548, %v644
        %v646 = vpop.f32.mrf.mxu0
        %647 = vdwg.mxu0
        %v648 = vtanh.pop %v618
        %v649 = vtanh.pop %v621
        %v650 = vtanh.pop %v626
        %v651 = vtanh.pop %v629
        %v652 = vtanh.pop %v634
        %v653 = vtanh.pop %v637
        %v654 = vtanh.pop %v642
        %v655 = vtanh.pop %v645
        %v656 = vld [vmem:[%s3] sm:$0xf]
        %v657 = vld [vmem:[%s3 + $0x4] sm:$0xf]
        %v658 = vpack.c.bf16 %v649, %v648
        %v659 = vpack.c.bf16 %v651, %v650
        %v660 = vpack.c.bf16 %v653, %v652
        %v661 = vpack.c.bf16 %v655, %v654
        %v662 = vld [vmem:[%s6] sm:$0xff]
        %v663 = vld [vmem:[%s6 + $0x8] sm:$0xff]
        %665 = vset.pattern.permute.xlu0 0
        %666 = vperm.xlu0 %665, %v662
        %v667 = vpop.permute.xlu0 %666
        %670 = vset.pattern.permute.xlu0 0
        %671 = vperm.xlu0 %670, %v663
        %v672 = vpop.permute.xlu0 %671
        %v676 = vunpack.c.l.b16 %v656
        %v677 = vunpack.c.l.b16 %v657
        %v678 = vpack.c.b16 %v677, %v676
        %v680 = vsel %vm570, %v678, 0
        %682 = vmatprep.subr.bf16.mxu0 0
        %683 = vmatpush1.bf16.msra.mxu0 0
        %684 = vmatprep.subr.bf16.mxu0 0
        %685 = vmatpush1.bf16.msra.mxu0 0
        %686 = vmatprep.subr.bf16.mxu0 0
        %687 = vmatpush1.bf16.msra.mxu0 0
        %688 = vmatprep.subr.bf16.mxu0 0
        %689 = vmatpush1.bf16.msra.mxu0 0
        %690 = vmatprep.subr.bf16.mxu0 0
        %691 = vmatpush1.bf16.msra.mxu0 %v661
        %692 = vmatprep.subr.bf16.mxu0 0
        %693 = vmatpush1.bf16.msra.mxu0 %v660
        %694 = vmatprep.subr.bf16.mxu0 0
        %695 = vmatpush1.bf16.msra.mxu0 %v659
        %696 = vmatprep.subr.bf16.mxu0 0
        %697 = vmatpush1.bf16.msra.mxu0 %v658
        %698 = vmatprep.subr.bf16.mxu0 0
        %699 = vmatpush2.bf16.msra.mxu0 0
        %700 = vmatprep.subr.bf16.mxu0 0
        %701 = vmatpush2.bf16.msra.mxu0 0
        %702 = vmatprep.subr.bf16.mxu0 0
        %703 = vmatpush2.bf16.msra.mxu0 0
        %704 = vmatprep.subr.bf16.mxu0 0
        %705 = vmatpush2.bf16.msra.mxu0 0
        %706 = vmatprep.subr.bf16.mxu0 0
        %707 = vmatpush2.bf16.msra.mxu0 0
        %708 = vmatprep.subr.bf16.mxu0 0
        %709 = vmatpush2.bf16.msra.mxu0 0
        %710 = vmatprep.subr.bf16.mxu0 0
        %711 = vmatpush2.bf16.msra.mxu0 0
        %712 = vmatprep.subr.bf16.mxu0 0
        %713 = vmatpush2.bf16.msra.mxu0 0
        %714 = vmatprep.mubr.bf16.mxu0 0
        %715 = vmatmul.mubr.bf16.gmra.mxu0 %v680
        %v716 = vpop.f32.mrf.mxu0
        %v717 = vadd.f32 %v667, %v716
        %v718 = vpop.f32.mrf.mxu0
        %v719 = vpop.f32.mrf.mxu0
        %v720 = vadd.f32 %v672, %v719
        %v721 = vpop.f32.mrf.mxu0
        %722 = vdwg.mxu0
        %723 = vst [vmem:[%s272] sm:$0xff] %v717
        %724 = vst [vmem:[%s272 + $0x8] sm:$0xff] %v720
        %s725 = sand.u32 %s181, 1
        %s726 = scalar_lea.sflag [#allocation3], %s725
        %s727 = sand.u32 %s181, 1
        %s728 = smul.addr %s727, 16
        %s729 = scalar_lea.vmem [#allocation2], %s728
        // Predicated region
        $region49: #{tpu_custom_call.1} parent=47 // pred_check
          %p730 = pneg %p191
        $region50: #{tpu_custom_call.1} parent=47 // pred_check_branch
          %732 = sbr.rel (%p730) target = $region52
        $region51: #{tpu_custom_call.1} parent=47 // pred_region
          %s734 = ssub.s32 256, 256
          %735 = vsyncadd %s726, %s734
          %s736 = smul.addr %s21, 128
          %s737 = scalar_lea.hbm %s7, %s736
          %s738 = sshll.u32 %s729, 4
          %s739 = int_to_ptr.vmem [resolvable:$true] %s738
          %744 = dma.vmem_to_hbm [thread:$0]  %s739, 256, %s737, %s726, 128, 256, 8
        $region52: #{tpu_custom_call.1} parent=47 // pred_fallthru
          _
      $region48: #{tpu_custom_call.1} parent=5 // pred_fallthru
        _
      %p745 = scmp.le.s32.totalorder 2, %s16
      // Predicated region
      $region53: #{tpu_custom_call.1} parent=5 // pred_check
        %p746 = pneg %p745
      $region54: #{tpu_custom_call.1} parent=5 // pred_check_branch
        %748 = sbr.rel (%p746) target = $region56
      $region55: #{tpu_custom_call.1} parent=5 // pred_region
        %s749 = ssub.s32 %s16, 2
        // Predicated region
        $region57: #{tpu_custom_call.1} parent=55 // pred_check
          %p750 = pneg %p197
        $region58: #{tpu_custom_call.1} parent=55 // pred_check_branch
          %752 = sbr.rel (%p750) target = $region60
        $region59: #{tpu_custom_call.1} parent=55 // pred_region
          %s753 = sand.u32 %s182, 1
          %s754 = scalar_lea.sflag [#allocation3], %s753
          %s755 = sand.u32 %s182, 1
          %s756 = smul.addr %s755, 16
          %s757 = scalar_lea.vmem [#allocation2], %s756
          %758 = dma.done %s754, 256
        $region60: #{tpu_custom_call.1} parent=55 // pred_fallthru
          _
      $region56: #{tpu_custom_call.1} parent=5 // pred_fallthru
        _
    $region6: #{tpu_custom_call.1} parent=1 // loop_footer
      %s20 = sadd.s32 1, %s16
    $region7: #{tpu_custom_call.1} parent=1 // loop_footer_branch
      %15 = sbr.rel target = $region3
    $region8: #{tpu_custom_call.1} parent=1 // loop_exit
      _
    %759 = vsyncpa [#allocation3], 1
    %s760 = scalar_lea.sflag [#allocation3], 1
    %761 = vsyncpa %s760, 1

</llo_original>
